<compile_context>
chip_gen: v6e
topology: v6e:2x2x1
jax: 0.10.0
libtpu: 0.0.40
codegen_flags: <defaults>
</compile_context>

<pallas_src>
import functools

import jax
import jax.numpy as jnp
from jax.experimental import pallas as pl
from jax.experimental.pallas import tpu as pltpu


def _round_up(n, m):
    return ((n + m - 1) // m) * m


def _gru_linear_kernel(x_ref, w1t_ref, w2t_ref, o_ref):
    # x_ref  : [tm, input_size]         batch tile
    # w1t_ref: [input_size, hidden_p]   pre-transposed, lane-padded Fc1 weight ([K, N])
    # w2t_ref: [hidden_p, output_p]     pre-transposed, lane-padded Fc2 weight ([K, N])
    # Fc1 + ReLU (ReLU stays on the f32 accumulator; v5e has no bf16 VPU).
    h = jnp.dot(x_ref[...], w1t_ref[...], preferred_element_type=jnp.float32)
    h = jnp.maximum(h, 0.0)
    # bf16-weight path: feed the second MXU contraction a matching-dtype LHS.
    if h.dtype != w2t_ref.dtype:
        h = h.astype(w2t_ref.dtype)
    # NOTE: default MXU precision is ample at these K; for strict f32 fidelity at
    # large K, switch to deliberate bf16 weights or a higher-precision reference.
    y = jnp.dot(h, w2t_ref[...], preferred_element_type=jnp.float32)
    o_ref[...] = y.astype(o_ref.dtype)


def prepare_gru_linear_params(w1, w2, *, lane=128, dtype=None):
    """One-time weight prep: transpose to MXU-native [K, N] and zero-pad lane-dense.

    Call once at model init / weight load — NOT per forward (that is the point of
    hoisting this out of the jitted call). `dtype=jnp.bfloat16` is the recommended
    throughput path on v6e/v7x (accumulation stays f32 inside the kernel).
    """
    hidden_size, input_size = w1.shape
    output_size, hid_chk = w2.shape
    assert hid_chk == hidden_size
    if dtype is not None:
        w1 = w1.astype(dtype)
        w2 = w2.astype(dtype)
    hid_p = _round_up(hidden_size, lane)
    out_p = _round_up(output_size, lane)
    # Zero padding is exact: padded h columns are relu(0)=0 and padded w2t rows are 0,
    # so the visible outputs are bit-identical to the unpadded computation.
    w1t_p = jnp.zeros((input_size, hid_p), w1.dtype).at[:, :hidden_size].set(w1.T)
    w2t_p = jnp.zeros((hid_p, out_p), w2.dtype).at[:hidden_size, :output_size].set(w2.T)
    return w1t_p, w2t_p


@functools.partial(jax.jit, static_argnames=("output_size", "block_rows"))
def gru_linear_forward(x, w1t_p, w2t_p, *, output_size, block_rows=512):
    """forward(x) = relu(x @ W1^T) @ W2^T with prepared (transposed, padded) weights.

    x      : [batch, input_size]
    w1t_p  : [input_size, hidden_p]   from prepare_gru_linear_params
    w2t_p  : [hidden_p, output_p]     from prepare_gru_linear_params
    returns: [batch, output_size]

    block_rows: max batch tile. 512-1024 is a good default on v6e (128 MiB VMEM);
    128-256 on v5e/v7x. The tile is automatically rounded to the input dtype's
    sublane packing and capped so the grid has >= 2 parallel steps when possible.
    """
    batch, input_size = x.shape
    in_chk, hid_p = w1t_p.shape
    hid_chk, out_p = w2t_p.shape
    assert in_chk == input_size and hid_chk == hid_p
    assert out_p % 128 == 0, "prepare_gru_linear_params must lane-pad the output dim"

    # Batch tile: respect sublane packing of the input dtype (8 f32 / 16 bf16 / 32 i8).
    sublane = {4: 8, 2: 16, 1: 32}.get(jnp.dtype(x.dtype).itemsize, 8)
    tm = max(sublane, min(block_rows, _round_up(batch, sublane)))
    if batch >= 2 * sublane:
        # Keep >= 2 grid steps so ("parallel",) can feed both v7x TensorCores.
        tm = min(tm, _round_up(pl.cdiv(batch, 2), sublane))
    grid = (pl.cdiv(batch, tm),)  # partial final block is clipped by Pallas; no jnp.pad

    # VMEM budget: double-buffered x/out tiles + (default 2-buffered) resident weights.
    x_isz = jnp.dtype(x.dtype).itemsize
    w_isz = jnp.dtype(w1t_p.dtype).itemsize
    need = (2 * tm * input_size * x_isz
            + 2 * (input_size * hid_p + hid_p * out_p) * w_isz
            + 2 * tm * out_p * x_isz)
    vmem_limit = int(min(64 << 20, max(32 << 20, 2 * need + (1 << 20))))

    out = pl.pallas_call(
        _gru_linear_kernel,
        out_shape=jax.ShapeDtypeStruct((batch, out_p), x.dtype),
        grid=grid,
        in_specs=[
            # Batch tile marches along the grid.
            pl.BlockSpec((tm, input_size), lambda i: (i, 0)),
            # Weights: constant index_map -> fetched once, resident across steps.
            pl.BlockSpec((input_size, hid_p), lambda i: (0, 0)),
            pl.BlockSpec((hid_p, out_p), lambda i: (0, 0)),
        ],
        # Lane-dense (multiple-of-128) output block -> unmasked full-vreg stores.
        out_specs=pl.BlockSpec((tm, out_p), lambda i: (i, 0)),
        compiler_params=pltpu.CompilerParams(
            dimension_semantics=("parallel",),  # batch tiles independent (v7x megacore)
            vmem_limit_bytes=vmem_limit,
        ),
    )(x, w1t_p, w2t_p)

    # Drop the lane padding (cheap: only output_size real columns are consumed).
    return out[:, :output_size]


def reference_forward(x, w1, w2):
    h = jnp.maximum(x @ w1.T, 0.0)
    return h @ w2.T


if __name__ == "__main__":
    # Small but grid-exercising shapes: batch=256 -> tm=128 -> 2 grid steps.
    batch, input_size, hidden_size, output_size = 256, 16, 32, 8

    key = jax.random.PRNGKey(0)
    k_x, k_w1, k_w2 = jax.random.split(key, 3)

    x = jax.random.normal(k_x, (batch, input_size), dtype=jnp.float32)
    # PyTorch nn.Linear weight shapes: [out, in].
    w1 = jax.random.normal(k_w1, (hidden_size, input_size), dtype=jnp.float32) * 0.1
    w2 = jax.random.normal(k_w2, (output_size, hidden_size), dtype=jnp.float32) * 0.1

    # One-time prep (transpose + lane-padding) — model-init work, not per-forward.
    w1t_p, w2t_p = prepare_gru_linear_params(w1, w2)

    out = jax.block_until_ready(
        gru_linear_forward(x, w1t_p, w2t_p, output_size=output_size))

    ref = reference_forward(x, w1, w2)
    assert out.shape == (batch, output_size)
    assert jnp.allclose(out, ref, atol=1e-5, rtol=1e-5), "mismatch vs reference"

    # Ragged batch: no host-side padding; Pallas clips the partial final block.
    out_ragged = jax.block_until_ready(
        gru_linear_forward(x[:200], w1t_p, w2t_p, output_size=output_size))
    assert out_ragged.shape == (200, output_size)
    assert jnp.allclose(out_ragged, ref[:200], atol=1e-5, rtol=1e-5), "ragged mismatch"

    print("KERNEL_OK")
</pallas_src>

<mosaic_0001>
module attributes {stable_mosaic.version = 11 : i64} {
  func.func @_gru_linear_kernel(%arg0: i32, %arg1: memref<128x16xf32, #tpu.memory_space<vmem>>, %arg2: memref<16x128xf32, #tpu.memory_space<vmem>>, %arg3: memref<128x128xf32, #tpu.memory_space<vmem>>, %arg4: memref<128x128xf32, #tpu.memory_space<vmem>>) attributes {dimension_semantics = [#tpu.dimension_semantics<parallel>], iteration_bounds = array<i64: 2>, scalar_prefetch = 0 : i64, scratch_operands = 0 : i64, tpu.core_type = #tpu.core_type<tc>, window_params = [{transform_indices = @transform_0, window_bounds = array<i64: 128, 16>}, {pipeline_mode = #tpu.pipeline_mode<synchronous>, transform_indices = @transform_1, window_bounds = array<i64: 16, 128>}, {pipeline_mode = #tpu.pipeline_mode<synchronous>, transform_indices = @transform_2, window_bounds = array<i64: 128, 128>}, {transform_indices = @transform_3, window_bounds = array<i64: 128, 128>}]} {
    %c0 = arith.constant 0 : index
    %c0_0 = arith.constant 0 : index
    %0 = vector.load %arg1[%c0, %c0_0] : memref<128x16xf32, #tpu.memory_space<vmem>>, vector<128x16xf32>
    %c0_1 = arith.constant 0 : index
    %c0_2 = arith.constant 0 : index
    %1 = vector.load %arg2[%c0_1, %c0_2] : memref<16x128xf32, #tpu.memory_space<vmem>>, vector<16x128xf32>
    %cst = arith.constant dense<0.000000e+00> : vector<128x128xf32>
    %2 = tpu.matmul %0, %1, %cst {dimension_numbers = #tpu.dot_dimension_numbers<[1], [0], [0], [1], [0, 0, 1, 1], [], []>} : vector<128x16xf32>, vector<16x128xf32>, vector<128x128xf32> -> vector<128x128xf32>
    %cst_3 = arith.constant 0.000000e+00 : f32
    %3 = vector.broadcast %cst_3 : f32 to vector<128x128xf32>
    %4 = arith.maximumf %2, %3 : vector<128x128xf32>
    %c0_4 = arith.constant 0 : index
    %c0_5 = arith.constant 0 : index
    %5 = vector.load %arg3[%c0_4, %c0_5] : memref<128x128xf32, #tpu.memory_space<vmem>>, vector<128x128xf32>
    %cst_6 = arith.constant dense<0.000000e+00> : vector<128x128xf32>
    %6 = tpu.matmul %4, %5, %cst_6 {dimension_numbers = #tpu.dot_dimension_numbers<[1], [0], [0], [1], [0, 0, 1, 1], [], []>} : vector<128x128xf32>, vector<128x128xf32>, vector<128x128xf32> -> vector<128x128xf32>
    %c0_7 = arith.constant 0 : index
    %c0_8 = arith.constant 0 : index
    %7 = vector.load %arg4[%c0_7, %c0_8] : memref<128x128xf32, #tpu.memory_space<vmem>>, vector<128x128xf32>
    tpu.vector_store %arg4[%c0_7, %c0_8], %6 {strides = array<i32>} : memref<128x128xf32, #tpu.memory_space<vmem>>, vector<128x128xf32>,
    return
  }
  func.func @transform_0(%arg0: i32) -> (i32, i32) {
    %c0_i32 = arith.constant 0 : i32
    %c0_i32_0 = arith.constant 0 : i32
    return %arg0, %c0_i32 : i32, i32
  }
  func.func @transform_1(%arg0: i32) -> (i32, i32) {
    %c0_i32 = arith.constant 0 : i32
    %c0_i32_0 = arith.constant 0 : i32
    %c0_i32_1 = arith.constant 0 : i32
    return %c0_i32, %c0_i32_0 : i32, i32
  }
  func.func @transform_2(%arg0: i32) -> (i32, i32) {
    %c0_i32 = arith.constant 0 : i32
    %c0_i32_0 = arith.constant 0 : i32
    %c0_i32_1 = arith.constant 0 : i32
    return %c0_i32, %c0_i32_0 : i32, i32
  }
  func.func @transform_3(%arg0: i32) -> (i32, i32) {
    %c0_i32 = arith.constant 0 : i32
    %c0_i32_0 = arith.constant 0 : i32
    return %arg0, %c0_i32 : i32, i32
  }
}

</mosaic_0001>

<llo_original>
// kernel: gru_linear_forward.1
$region0: #{gru_linear_forward.1}
  #allocation0 [shape = 'u32[]', space=smem, size = 0x4, offset = 0x4, fixed_abs, tag = 'smem constant byte address 0x4 - core index']
  #allocation1 [shape = 'u32[144,128]{1,0:T(1,128)}', space=vmem, size = 0x12000, scoped, tag = 'internal scratch']
  %s0 = inlined_call_operand.vmem [shape: f32[256,16], index: 0, kind: input, shape index: {}]
  %s1 = inlined_call_operand.vmem [shape: f32[16,128], index: 1, kind: input, shape index: {}]
  %s2 = inlined_call_operand.vmem [shape: f32[128,128], index: 2, kind: input, shape index: {}]
  %s3 = inlined_call_operand.vmem [shape: f32[256,128], index: 3, kind: output, shape index: {}]
  %s4 = sld [smem:[#allocation0]]
  $region45: #{gru_linear_forward.1} parent=0
    _
  %s6 = ssub.s32 1, %s4
  %s7 = scalar_select 0, %s6, %s4
  loop: start=0, step=1, limit=4
  $region2: #{gru_linear_forward.1} parent=0 // loop_pre_header
    _
  $region3: #{gru_linear_forward.1} parent=0 // loop_header
    %s9 = sphi 0, %s13
    %p10 = scmp.ge.s32.totalorder %s9, 4
    %s19 = sphi 0, %s21
    %s22 = sphi 0, %s19
    %s23 = sphi 0, %s22
    %s39 = sphi 0, %s23
    %s43 = sphi 0, %s43
    %s45 = sphi 0, %s43
    %s46 = sphi 0, %s45
    %s60 = sphi 0, %s46
    %s64 = sphi 0, %s64
    %s66 = sphi 0, %s64
    %s67 = sphi 0, %s66
    %s81 = sphi 0, %s67
    %s87 = sphi 0, %s89
    %s90 = sphi 0, %s87
    %s91 = sphi 0, %s90
    %s107 = sphi 0, %s91
  $region4: #{gru_linear_forward.1} parent=0 // loop_header_branch
    %12 = sbr.rel (%p10) target = $region8
  $region5: #{gru_linear_forward.1} parent=0 // loop_body
    %s14 = ssub.s32 %s9, 1
    %s15 = ssub.s32 %s9, 2
    %s16 = sadd.s32 %s9, 1
    %s17 = ssub.s32 %s9, %s16
    %p18 = scmp.eq.s32.totalorder %s17, 0
    %s20 = sadd.s32 %s19, 1
    %s21 = scalar_select %p18, %s19, %s20
    %p24 = pneg %p18
    %p25 = scmp.eq.s32.totalorder %s9, 1
    %p26 = por %p24, %p25
    %p27 = scmp.ne.s32.totalorder %s19, %s22
    %p28 = scmp.eq.s32.totalorder %s9, 0
    %p29 = por %p27, %p28
    %p30 = scmp.ne.s32.totalorder %s19, %s22
    %p31 = scmp.eq.s32.totalorder %s14, 1
    %p32 = por %p30, %p31
    %p33 = scmp.ne.s32.totalorder %s22, %s23
    %p34 = scmp.eq.s32.totalorder %s14, 0
    %p35 = por %p33, %p34
    %p36 = scmp.ne.s32.totalorder %s22, %s23
    %p37 = scmp.eq.s32.totalorder %s15, 1
    %p38 = por %p36, %p37
    %p40 = scmp.ne.s32.totalorder %s23, %s39
    %p41 = scmp.eq.s32.totalorder %s15, 0
    %p42 = por %p40, %p41
    %s44 = sadd.s32 %s43, 1
    %p47 = scmp.eq.s32.totalorder %s9, 1
    %p48 = scmp.ne.s32.totalorder %s43, %s45
    %p49 = scmp.eq.s32.totalorder %s9, 0
    %p50 = por %p48, %p49
    %p51 = scmp.ne.s32.totalorder %s43, %s45
    %p52 = scmp.eq.s32.totalorder %s14, 1
    %p53 = por %p51, %p52
    %p54 = scmp.ne.s32.totalorder %s45, %s46
    %p55 = scmp.eq.s32.totalorder %s14, 0
    %p56 = por %p54, %p55
    %p57 = scmp.ne.s32.totalorder %s45, %s46
    %p58 = scmp.eq.s32.totalorder %s15, 1
    %p59 = por %p57, %p58
    %p61 = scmp.ne.s32.totalorder %s46, %s60
    %p62 = scmp.eq.s32.totalorder %s15, 0
    %p63 = por %p61, %p62
    %s65 = sadd.s32 %s64, 1
    %p68 = scmp.eq.s32.totalorder %s9, 1
    %p69 = scmp.ne.s32.totalorder %s64, %s66
    %p70 = scmp.eq.s32.totalorder %s9, 0
    %p71 = por %p69, %p70
    %p72 = scmp.ne.s32.totalorder %s64, %s66
    %p73 = scmp.eq.s32.totalorder %s14, 1
    %p74 = por %p72, %p73
    %p75 = scmp.ne.s32.totalorder %s66, %s67
    %p76 = scmp.eq.s32.totalorder %s14, 0
    %p77 = por %p75, %p76
    %p78 = scmp.ne.s32.totalorder %s66, %s67
    %p79 = scmp.eq.s32.totalorder %s15, 1
    %p80 = por %p78, %p79
    %p82 = scmp.ne.s32.totalorder %s67, %s81
    %p83 = scmp.eq.s32.totalorder %s15, 0
    %p84 = por %p82, %p83
    %s85 = ssub.s32 %s9, %s16
    %p86 = scmp.eq.s32.totalorder %s85, 0
    %s88 = sadd.s32 %s87, 1
    %s89 = scalar_select %p86, %s87, %s88
    %p92 = pneg %p86
    %p93 = scmp.eq.s32.totalorder %s9, 1
    %p94 = por %p92, %p93
    %p95 = scmp.ne.s32.totalorder %s87, %s90
    %p96 = scmp.eq.s32.totalorder %s9, 0
    %p97 = por %p95, %p96
    %p98 = scmp.ne.s32.totalorder %s87, %s90
    %p99 = scmp.eq.s32.totalorder %s14, 1
    %p100 = por %p98, %p99
    %p101 = scmp.ne.s32.totalorder %s90, %s91
    %p102 = scmp.eq.s32.totalorder %s14, 0
    %p103 = por %p101, %p102
    %p104 = scmp.ne.s32.totalorder %s90, %s91
    %p105 = scmp.eq.s32.totalorder %s15, 1
    %p106 = por %p104, %p105
    %p108 = scmp.ne.s32.totalorder %s91, %s107
    %p109 = scmp.eq.s32.totalorder %s15, 0
    %p110 = por %p108, %p109
    %p111 = scmp.le.s32.totalorder 1, %s9
    %p112 = scmp.lt.s32.totalorder %s9, 3
    %p113 = pnand %p111, %p112
    %p114 = pneg %p113
    // Predicated region
    $region9: #{gru_linear_forward.1} parent=5 // pred_check
      _
    $region10: #{gru_linear_forward.1} parent=5 // pred_check_branch
      %116 = sbr.rel (%p113) target = $region12
    $region11: #{gru_linear_forward.1} parent=5 // pred_region
      %s117 = ssub.s32 %s9, 1
      // Predicated region
      $region13: #{gru_linear_forward.1} parent=11 // pred_check
        %p118 = pneg %p56
      $region14: #{gru_linear_forward.1} parent=11 // pred_check_branch
        %120 = sbr.rel (%p118) target = $region16
      $region15: #{gru_linear_forward.1} parent=11 // pred_region
        _
      $region16: #{gru_linear_forward.1} parent=11 // pred_fallthru
        _
      // Predicated region
      $region17: #{gru_linear_forward.1} parent=11 // pred_check
        %p121 = pneg %p77
      $region18: #{gru_linear_forward.1} parent=11 // pred_check_branch
        %123 = sbr.rel (%p121) target = $region20
      $region19: #{gru_linear_forward.1} parent=11 // pred_region
        _
      $region20: #{gru_linear_forward.1} parent=11 // pred_fallthru
        _
    $region12: #{gru_linear_forward.1} parent=5 // pred_fallthru
      _
    %p124 = scmp.lt.s32.totalorder %s9, 2
    // Predicated region
    $region21: #{gru_linear_forward.1} parent=5 // pred_check
      %p125 = pneg %p124
    $region22: #{gru_linear_forward.1} parent=5 // pred_check_branch
      %127 = sbr.rel (%p125) target = $region24
    $region23: #{gru_linear_forward.1} parent=5 // pred_region
      // Predicated region
      $region25: #{gru_linear_forward.1} parent=23 // pred_check
        %p128 = pneg %p29
      $region26: #{gru_linear_forward.1} parent=23 // pred_check_branch
        %130 = sbr.rel (%p128) target = $region28
      $region27: #{gru_linear_forward.1} parent=23 // pred_region
        %s131 = smul.u32 16, %s9
        %p132 = scmp.lt.s32.totalorder %s131, 31
        %s133 = scalar_select %p132, %s131, 31
        %s134 = smul.addr %s133, 8
        %s135 = scalar_lea.vmem %s0, %s134
        %s136 = smul.u32 16, %s9
      $region28: #{gru_linear_forward.1} parent=23 // pred_fallthru
        _
    $region24: #{gru_linear_forward.1} parent=5 // pred_fallthru
      _
    %p137 = scmp.le.s32.totalorder 1, %s9
    %p138 = scmp.lt.s32.totalorder %s9, 3
    %p139 = pnand %p137, %p138
    %p140 = pneg %p139
    // Predicated region
    $region29: #{gru_linear_forward.1} parent=5 // pred_check
      _
    $region30: #{gru_linear_forward.1} parent=5 // pred_check_branch
      %142 = sbr.rel (%p139) target = $region32
    $region31: #{gru_linear_forward.1} parent=5 // pred_region
      %s143 = ssub.s32 %s9, 1
      %s144 = smul.u32 16, %s14
      %p145 = scmp.lt.s32.totalorder %s144, 31
      %s146 = scalar_select %p145, %s144, 31
      %s147 = smul.addr %s146, 8
      %s148 = scalar_lea.vmem %s0, %s147
      %p149 = pneg %p35
      %p150 = pneg %p32
      %p151 = pneg %p56
      %p152 = pneg %p53
      %p153 = pneg %p77
      %p154 = pneg %p74
      %p155 = pneg %p103
      %p156 = pneg %p100
      %s157 = smul.u32 16, %s14
      %p158 = scmp.lt.s32.totalorder %s157, 31
      %s159 = scalar_select %p158, %s157, 31
      %s160 = smul.addr %s159, 8
      %s161 = scalar_lea.vmem %s3, %s160
      %s162 = smul.u32 16, %s14
      %p163 = scmp.lt.s32.totalorder %s162, 31
      %s164 = scalar_select %p163, %s162, 31
      %s165 = smul.addr %s164, 8
      %s166 = scalar_lea.vmem %s0, %s165
      %s167 = smul.u32 16, %s14
      %s168 = smul.u32 16, %s14
      %p169 = scmp.lt.s32.totalorder %s168, 31
      %s170 = scalar_select %p169, %s168, 31
      %s171 = smul.addr %s170, 8
      %s172 = scalar_lea.vmem %s3, %s171
      %s173 = smul.u32 16, %s14
      %v174 = vld [vmem:[%s166] sm:$0xff]
      %v175 = vld [vmem:[%s166 + $0x8] sm:$0xff]
      %v176 = vld [vmem:[%s166 + $0x10] sm:$0xff]
      %v177 = vld [vmem:[%s166 + $0x18] sm:$0xff]
      %v178 = vld [vmem:[%s166 + $0x20] sm:$0xff]
      %v179 = vld [vmem:[%s166 + $0x28] sm:$0xff]
      %v180 = vld [vmem:[%s166 + $0x30] sm:$0xff]
      %v181 = vld [vmem:[%s166 + $0x38] sm:$0xff]
      %v182 = vld [vmem:[%s166 + $0x40] sm:$0xff]
      %v183 = vld [vmem:[%s166 + $0x48] sm:$0xff]
      %v184 = vld [vmem:[%s166 + $0x50] sm:$0xff]
      %v185 = vld [vmem:[%s166 + $0x58] sm:$0xff]
      %v186 = vld [vmem:[%s166 + $0x60] sm:$0xff]
      %v187 = vld [vmem:[%s166 + $0x68] sm:$0xff]
      %v188 = vld [vmem:[%s166 + $0x70] sm:$0xff]
      %v189 = vld [vmem:[%s166 + $0x78] sm:$0xff]
      %v190 = vld [vmem:[%s1] sm:$0xff]
      %v191 = vld [vmem:[%s1 + $0x8] sm:$0xff]
      %vm192 = vcmask 130048
      %v194 = vsel %vm192, %v174, 0
      %v197 = vsel %vm192, %v175, 0
      %v200 = vsel %vm192, %v176, 0
      %v203 = vsel %vm192, %v177, 0
      %v206 = vsel %vm192, %v178, 0
      %v209 = vsel %vm192, %v179, 0
      %v212 = vsel %vm192, %v180, 0
      %v215 = vsel %vm192, %v181, 0
      %v218 = vsel %vm192, %v182, 0
      %v221 = vsel %vm192, %v183, 0
      %v224 = vsel %vm192, %v184, 0
      %v227 = vsel %vm192, %v185, 0
      %v230 = vsel %vm192, %v186, 0
      %v233 = vsel %vm192, %v187, 0
      %v236 = vsel %vm192, %v188, 0
      %v239 = vsel %vm192, %v189, 0
      %241 = vmatprep.subr.mxu0 0.0
      %242 = vmatpush1.msra.mxu0 0.0
      %243 = vmatprep.subr.mxu0 0.0
      %244 = vmatpush1.msra.mxu0 0.0
      %245 = vmatprep.subr.mxu0 0.0
      %246 = vmatpush1.msra.mxu0 0.0
      %247 = vmatprep.subr.mxu0 0.0
      %248 = vmatpush1.msra.mxu0 0.0
      %249 = vmatprep.subr.mxu0 0.0
      %250 = vmatpush1.msra.mxu0 0.0
      %251 = vmatprep.subr.mxu0 0.0
      %252 = vmatpush1.msra.mxu0 0.0
      %253 = vmatprep.subr.mxu0 0.0
      %254 = vmatpush1.msra.mxu0 0.0
      %255 = vmatprep.subr.mxu0 0.0
      %256 = vmatpush1.msra.mxu0 0.0
      %257 = vmatprep.subr.mxu0 0.0
      %258 = vmatpush1.msra.mxu0 0.0
      %259 = vmatprep.subr.mxu0 0.0
      %260 = vmatpush1.msra.mxu0 0.0
      %261 = vmatprep.subr.mxu0 0.0
      %262 = vmatpush1.msra.mxu0 0.0
      %263 = vmatprep.subr.mxu0 0.0
      %264 = vmatpush1.msra.mxu0 0.0
      %265 = vmatprep.subr.mxu0 0.0
      %266 = vmatpush1.msra.mxu0 0.0
      %267 = vmatprep.subr.mxu0 0.0
      %268 = vmatpush1.msra.mxu0 0.0
      %269 = vmatprep.subr.mxu0 0.0
      %270 = vmatpush1.msra.mxu0 %v191
      %271 = vmatprep.subr.mxu0 0.0
      %272 = vmatpush1.msra.mxu0 %v190
      %273 = vmatprep.subr.mxu0 0.0
      %274 = vmatpush2.msra.mxu0 0.0
      %275 = vmatprep.subr.mxu0 0.0
      %276 = vmatpush2.msra.mxu0 0.0
      %277 = vmatprep.subr.mxu0 0.0
      %278 = vmatpush2.msra.mxu0 0.0
      %279 = vmatprep.subr.mxu0 0.0
      %280 = vmatpush2.msra.mxu0 0.0
      %281 = vmatprep.subr.mxu0 0.0
      %282 = vmatpush2.msra.mxu0 0.0
      %283 = vmatprep.subr.mxu0 0.0
      %284 = vmatpush2.msra.mxu0 0.0
      %285 = vmatprep.subr.mxu0 0.0
      %286 = vmatpush2.msra.mxu0 0.0
      %287 = vmatprep.subr.mxu0 0.0
      %288 = vmatpush2.msra.mxu0 0.0
      %289 = vmatprep.subr.mxu0 0.0
      %290 = vmatpush2.msra.mxu0 0.0
      %291 = vmatprep.subr.mxu0 0.0
      %292 = vmatpush2.msra.mxu0 0.0
      %293 = vmatprep.subr.mxu0 0.0
      %294 = vmatpush2.msra.mxu0 0.0
      %295 = vmatprep.subr.mxu0 0.0
      %296 = vmatpush2.msra.mxu0 0.0
      %297 = vmatprep.subr.mxu0 0.0
      %298 = vmatpush2.msra.mxu0 0.0
      %299 = vmatprep.subr.mxu0 0.0
      %300 = vmatpush2.msra.mxu0 0.0
      %301 = vmatprep.subr.mxu0 0.0
      %302 = vmatpush2.msra.mxu0 0.0
      %303 = vmatprep.subr.mxu0 0.0
      %304 = vmatpush2.msra.mxu0 0.0
      %305 = vmatprep.mubr.f32.mxu0 0.0
      %306 = vmatmul.mubr.f32.gmra.mxu0 %v194
      %v307 = vpop.f32.mrf.mxu0
      %v308 = vadd.f32 0.0, %v307
      %v309 = vpop.f32.mrf.mxu0
      %310 = vmatprep.mubr.f32.mxu0 0.0
      %311 = vmatmul.mubr.f32.gmra.mxu0 %v197
      %v312 = vpop.f32.mrf.mxu0
      %v313 = vadd.f32 0.0, %v312
      %v314 = vpop.f32.mrf.mxu0
      %315 = vmatprep.mubr.f32.mxu0 0.0
      %316 = vmatmul.mubr.f32.gmra.mxu0 %v200
      %v317 = vpop.f32.mrf.mxu0
      %v318 = vadd.f32 0.0, %v317
      %v319 = vpop.f32.mrf.mxu0
      %320 = vmatprep.mubr.f32.mxu0 0.0
      %321 = vmatmul.mubr.f32.gmra.mxu0 %v203
      %v322 = vpop.f32.mrf.mxu0
      %v323 = vadd.f32 0.0, %v322
      %v324 = vpop.f32.mrf.mxu0
      %325 = vmatprep.mubr.f32.mxu0 0.0
      %326 = vmatmul.mubr.f32.gmra.mxu0 %v206
      %v327 = vpop.f32.mrf.mxu0
      %v328 = vadd.f32 0.0, %v327
      %v329 = vpop.f32.mrf.mxu0
      %330 = vmatprep.mubr.f32.mxu0 0.0
      %331 = vmatmul.mubr.f32.gmra.mxu0 %v209
      %v332 = vpop.f32.mrf.mxu0
      %v333 = vadd.f32 0.0, %v332
      %v334 = vpop.f32.mrf.mxu0
      %335 = vmatprep.mubr.f32.mxu0 0.0
      %336 = vmatmul.mubr.f32.gmra.mxu0 %v212
      %v337 = vpop.f32.mrf.mxu0
      %v338 = vadd.f32 0.0, %v337
      %v339 = vpop.f32.mrf.mxu0
      %340 = vmatprep.mubr.f32.mxu0 0.0
      %341 = vmatmul.mubr.f32.gmra.mxu0 %v215
      %v342 = vpop.f32.mrf.mxu0
      %v343 = vadd.f32 0.0, %v342
      %v344 = vpop.f32.mrf.mxu0
      %345 = vmatprep.mubr.f32.mxu0 0.0
      %346 = vmatmul.mubr.f32.gmra.mxu0 %v218
      %v347 = vpop.f32.mrf.mxu0
      %v348 = vadd.f32 0.0, %v347
      %v349 = vpop.f32.mrf.mxu0
      %350 = vmatprep.mubr.f32.mxu0 0.0
      %351 = vmatmul.mubr.f32.gmra.mxu0 %v221
      %v352 = vpop.f32.mrf.mxu0
      %v353 = vadd.f32 0.0, %v352
      %v354 = vpop.f32.mrf.mxu0
      %355 = vmatprep.mubr.f32.mxu0 0.0
      %356 = vmatmul.mubr.f32.gmra.mxu0 %v224
      %v357 = vpop.f32.mrf.mxu0
      %v358 = vadd.f32 0.0, %v357
      %v359 = vpop.f32.mrf.mxu0
      %360 = vmatprep.mubr.f32.mxu0 0.0
      %361 = vmatmul.mubr.f32.gmra.mxu0 %v227
      %v362 = vpop.f32.mrf.mxu0
      %v363 = vadd.f32 0.0, %v362
      %v364 = vpop.f32.mrf.mxu0
      %365 = vmatprep.mubr.f32.mxu0 0.0
      %366 = vmatmul.mubr.f32.gmra.mxu0 %v230
      %v367 = vpop.f32.mrf.mxu0
      %v368 = vadd.f32 0.0, %v367
      %v369 = vpop.f32.mrf.mxu0
      %370 = vmatprep.mubr.f32.mxu0 0.0
      %371 = vmatmul.mubr.f32.gmra.mxu0 %v233
      %v372 = vpop.f32.mrf.mxu0
      %v373 = vadd.f32 0.0, %v372
      %v374 = vpop.f32.mrf.mxu0
      %375 = vmatprep.mubr.f32.mxu0 0.0
      %376 = vmatmul.mubr.f32.gmra.mxu0 %v236
      %v377 = vpop.f32.mrf.mxu0
      %v378 = vadd.f32 0.0, %v377
      %v379 = vpop.f32.mrf.mxu0
      %380 = vmatprep.mubr.f32.mxu0 0.0
      %381 = vmatmul.mubr.f32.gmra.mxu0 %v239
      %v382 = vpop.f32.mrf.mxu0
      %v383 = vadd.f32 0.0, %v382
      %v384 = vpop.f32.mrf.mxu0
      %385 = vdwg.mxu0
      %v386 = vmax.f32 %v308, 0.0
      %v387 = vmax.f32 %v313, 0.0
      %v388 = vmax.f32 %v318, 0.0
      %v389 = vmax.f32 %v323, 0.0
      %v390 = vmax.f32 %v328, 0.0
      %v391 = vmax.f32 %v333, 0.0
      %v392 = vmax.f32 %v338, 0.0
      %v393 = vmax.f32 %v343, 0.0
      %v394 = vmax.f32 %v348, 0.0
      %v395 = vmax.f32 %v353, 0.0
      %v396 = vmax.f32 %v358, 0.0
      %v397 = vmax.f32 %v363, 0.0
      %v398 = vmax.f32 %v368, 0.0
      %v399 = vmax.f32 %v373, 0.0
      %v400 = vmax.f32 %v378, 0.0
      %v401 = vmax.f32 %v383, 0.0
      %v402 = vld [vmem:[%s2] sm:$0xff]
      %v403 = vld [vmem:[%s2 + $0x8] sm:$0xff]
      %v404 = vld [vmem:[%s2 + $0x10] sm:$0xff]
      %v405 = vld [vmem:[%s2 + $0x18] sm:$0xff]
      %v406 = vld [vmem:[%s2 + $0x20] sm:$0xff]
      %v407 = vld [vmem:[%s2 + $0x28] sm:$0xff]
      %v408 = vld [vmem:[%s2 + $0x30] sm:$0xff]
      %v409 = vld [vmem:[%s2 + $0x38] sm:$0xff]
      %v410 = vld [vmem:[%s2 + $0x40] sm:$0xff]
      %v411 = vld [vmem:[%s2 + $0x48] sm:$0xff]
      %v412 = vld [vmem:[%s2 + $0x50] sm:$0xff]
      %v413 = vld [vmem:[%s2 + $0x58] sm:$0xff]
      %v414 = vld [vmem:[%s2 + $0x60] sm:$0xff]
      %v415 = vld [vmem:[%s2 + $0x68] sm:$0xff]
      %v416 = vld [vmem:[%s2 + $0x70] sm:$0xff]
      %v417 = vld [vmem:[%s2 + $0x78] sm:$0xff]
      %418 = vmatprep.subr.mxu0 0.0
      %419 = vmatpush1.msra.mxu0 %v417
      %420 = vmatprep.subr.mxu0 0.0
      %421 = vmatpush1.msra.mxu0 %v416
      %422 = vmatprep.subr.mxu0 0.0
      %423 = vmatpush1.msra.mxu0 %v415
      %424 = vmatprep.subr.mxu0 0.0
      %425 = vmatpush1.msra.mxu0 %v414
      %426 = vmatprep.subr.mxu0 0.0
      %427 = vmatpush1.msra.mxu0 %v413
      %428 = vmatprep.subr.mxu0 0.0
      %429 = vmatpush1.msra.mxu0 %v412
      %430 = vmatprep.subr.mxu0 0.0
      %431 = vmatpush1.msra.mxu0 %v411
      %432 = vmatprep.subr.mxu0 0.0
      %433 = vmatpush1.msra.mxu0 %v410
      %434 = vmatprep.subr.mxu0 0.0
      %435 = vmatpush1.msra.mxu0 %v409
      %436 = vmatprep.subr.mxu0 0.0
      %437 = vmatpush1.msra.mxu0 %v408
      %438 = vmatprep.subr.mxu0 0.0
      %439 = vmatpush1.msra.mxu0 %v407
      %440 = vmatprep.subr.mxu0 0.0
      %441 = vmatpush1.msra.mxu0 %v406
      %442 = vmatprep.subr.mxu0 0.0
      %443 = vmatpush1.msra.mxu0 %v405
      %444 = vmatprep.subr.mxu0 0.0
      %445 = vmatpush1.msra.mxu0 %v404
      %446 = vmatprep.subr.mxu0 0.0
      %447 = vmatpush1.msra.mxu0 %v403
      %448 = vmatprep.subr.mxu0 0.0
      %449 = vmatpush1.msra.mxu0 %v402
      %450 = vmatprep.subr.mxu0 0.0
      %451 = vmatpush2.msra.mxu0 0.0
      %452 = vmatprep.subr.mxu0 0.0
      %453 = vmatpush2.msra.mxu0 0.0
      %454 = vmatprep.subr.mxu0 0.0
      %455 = vmatpush2.msra.mxu0 0.0
      %456 = vmatprep.subr.mxu0 0.0
      %457 = vmatpush2.msra.mxu0 0.0
      %458 = vmatprep.subr.mxu0 0.0
      %459 = vmatpush2.msra.mxu0 0.0
      %460 = vmatprep.subr.mxu0 0.0
      %461 = vmatpush2.msra.mxu0 0.0
      %462 = vmatprep.subr.mxu0 0.0
      %463 = vmatpush2.msra.mxu0 0.0
      %464 = vmatprep.subr.mxu0 0.0
      %465 = vmatpush2.msra.mxu0 0.0
      %466 = vmatprep.subr.mxu0 0.0
      %467 = vmatpush2.msra.mxu0 0.0
      %468 = vmatprep.subr.mxu0 0.0
      %469 = vmatpush2.msra.mxu0 0.0
      %470 = vmatprep.subr.mxu0 0.0
      %471 = vmatpush2.msra.mxu0 0.0
      %472 = vmatprep.subr.mxu0 0.0
      %473 = vmatpush2.msra.mxu0 0.0
      %474 = vmatprep.subr.mxu0 0.0
      %475 = vmatpush2.msra.mxu0 0.0
      %476 = vmatprep.subr.mxu0 0.0
      %477 = vmatpush2.msra.mxu0 0.0
      %478 = vmatprep.subr.mxu0 0.0
      %479 = vmatpush2.msra.mxu0 0.0
      %480 = vmatprep.subr.mxu0 0.0
      %481 = vmatpush2.msra.mxu0 0.0
      %482 = vmatprep.mubr.f32.mxu0 0.0
      %483 = vmatmul.mubr.f32.gmra.mxu0 %v386
      %v484 = vpop.f32.mrf.mxu0
      %v485 = vadd.f32 0.0, %v484
      %v486 = vpop.f32.mrf.mxu0
      %487 = vmatprep.mubr.f32.mxu0 0.0
      %488 = vmatmul.mubr.f32.gmra.mxu0 %v387
      %v489 = vpop.f32.mrf.mxu0
      %v490 = vadd.f32 0.0, %v489
      %v491 = vpop.f32.mrf.mxu0
      %492 = vmatprep.mubr.f32.mxu0 0.0
      %493 = vmatmul.mubr.f32.gmra.mxu0 %v388
      %v494 = vpop.f32.mrf.mxu0
      %v495 = vadd.f32 0.0, %v494
      %v496 = vpop.f32.mrf.mxu0
      %497 = vmatprep.mubr.f32.mxu0 0.0
      %498 = vmatmul.mubr.f32.gmra.mxu0 %v389
      %v499 = vpop.f32.mrf.mxu0
      %v500 = vadd.f32 0.0, %v499
      %v501 = vpop.f32.mrf.mxu0
      %502 = vmatprep.mubr.f32.mxu0 0.0
      %503 = vmatmul.mubr.f32.gmra.mxu0 %v390
      %v504 = vpop.f32.mrf.mxu0
      %v505 = vadd.f32 0.0, %v504
      %v506 = vpop.f32.mrf.mxu0
      %507 = vmatprep.mubr.f32.mxu0 0.0
      %508 = vmatmul.mubr.f32.gmra.mxu0 %v391
      %v509 = vpop.f32.mrf.mxu0
      %v510 = vadd.f32 0.0, %v509
      %v511 = vpop.f32.mrf.mxu0
      %512 = vmatprep.mubr.f32.mxu0 0.0
      %513 = vmatmul.mubr.f32.gmra.mxu0 %v392
      %v514 = vpop.f32.mrf.mxu0
      %v515 = vadd.f32 0.0, %v514
      %v516 = vpop.f32.mrf.mxu0
      %517 = vmatprep.mubr.f32.mxu0 0.0
      %518 = vmatmul.mubr.f32.gmra.mxu0 %v393
      %v519 = vpop.f32.mrf.mxu0
      %v520 = vadd.f32 0.0, %v519
      %v521 = vpop.f32.mrf.mxu0
      %522 = vmatprep.mubr.f32.mxu0 0.0
      %523 = vmatmul.mubr.f32.gmra.mxu0 %v394
      %v524 = vpop.f32.mrf.mxu0
      %v525 = vadd.f32 0.0, %v524
      %v526 = vpop.f32.mrf.mxu0
      %527 = vmatprep.mubr.f32.mxu0 0.0
      %528 = vmatmul.mubr.f32.gmra.mxu0 %v395
      %v529 = vpop.f32.mrf.mxu0
      %v530 = vadd.f32 0.0, %v529
      %v531 = vpop.f32.mrf.mxu0
      %532 = vmatprep.mubr.f32.mxu0 0.0
      %533 = vmatmul.mubr.f32.gmra.mxu0 %v396
      %v534 = vpop.f32.mrf.mxu0
      %v535 = vadd.f32 0.0, %v534
      %v536 = vpop.f32.mrf.mxu0
      %537 = vmatprep.mubr.f32.mxu0 0.0
      %538 = vmatmul.mubr.f32.gmra.mxu0 %v397
      %v539 = vpop.f32.mrf.mxu0
      %v540 = vadd.f32 0.0, %v539
      %v541 = vpop.f32.mrf.mxu0
      %542 = vmatprep.mubr.f32.mxu0 0.0
      %543 = vmatmul.mubr.f32.gmra.mxu0 %v398
      %v544 = vpop.f32.mrf.mxu0
      %v545 = vadd.f32 0.0, %v544
      %v546 = vpop.f32.mrf.mxu0
      %547 = vmatprep.mubr.f32.mxu0 0.0
      %548 = vmatmul.mubr.f32.gmra.mxu0 %v399
      %v549 = vpop.f32.mrf.mxu0
      %v550 = vadd.f32 0.0, %v549
      %v551 = vpop.f32.mrf.mxu0
      %552 = vmatprep.mubr.f32.mxu0 0.0
      %553 = vmatmul.mubr.f32.gmra.mxu0 %v400
      %v554 = vpop.f32.mrf.mxu0
      %v555 = vadd.f32 0.0, %v554
      %v556 = vpop.f32.mrf.mxu0
      %557 = vmatprep.mubr.f32.mxu0 0.0
      %558 = vmatmul.mubr.f32.gmra.mxu0 %v401
      %v559 = vpop.f32.mrf.mxu0
      %v560 = vadd.f32 0.0, %v559
      %v561 = vpop.f32.mrf.mxu0
      %562 = vdwg.mxu0
      %563 = vst [vmem:[%s172] sm:$0xff] %v485
      %564 = vst [vmem:[%s172 + $0x8] sm:$0xff] %v490
      %565 = vst [vmem:[%s172 + $0x10] sm:$0xff] %v495
      %566 = vst [vmem:[%s172 + $0x18] sm:$0xff] %v500
      %567 = vst [vmem:[%s172 + $0x20] sm:$0xff] %v505
      %568 = vst [vmem:[%s172 + $0x28] sm:$0xff] %v510
      %569 = vst [vmem:[%s172 + $0x30] sm:$0xff] %v515
      %570 = vst [vmem:[%s172 + $0x38] sm:$0xff] %v520
      %571 = vst [vmem:[%s172 + $0x40] sm:$0xff] %v525
      %572 = vst [vmem:[%s172 + $0x48] sm:$0xff] %v530
      %573 = vst [vmem:[%s172 + $0x50] sm:$0xff] %v535
      %574 = vst [vmem:[%s172 + $0x58] sm:$0xff] %v540
      %575 = vst [vmem:[%s172 + $0x60] sm:$0xff] %v545
      %576 = vst [vmem:[%s172 + $0x68] sm:$0xff] %v550
      %577 = vst [vmem:[%s172 + $0x70] sm:$0xff] %v555
      %578 = vst [vmem:[%s172 + $0x78] sm:$0xff] %v560
      %s579 = smul.u32 16, %s14
      %p580 = scmp.lt.s32.totalorder %s579, 31
      %s581 = scalar_select %p580, %s579, 31
      %s582 = smul.addr %s581, 8
      %s583 = scalar_lea.vmem %s3, %s582
      // Predicated region
      $region33: #{gru_linear_forward.1} parent=31 // pred_check
        %p584 = pneg %p100
      $region34: #{gru_linear_forward.1} parent=31 // pred_check_branch
        %586 = sbr.rel (%p584) target = $region36
      $region35: #{gru_linear_forward.1} parent=31 // pred_region
        %s587 = smul.u32 16, %s14
      $region36: #{gru_linear_forward.1} parent=31 // pred_fallthru
        _
    $region32: #{gru_linear_forward.1} parent=5 // pred_fallthru
      _
    %p588 = scmp.le.s32.totalorder 2, %s9
    // Predicated region
    $region37: #{gru_linear_forward.1} parent=5 // pred_check
      %p589 = pneg %p588
    $region38: #{gru_linear_forward.1} parent=5 // pred_check_branch
      %591 = sbr.rel (%p589) target = $region40
    $region39: #{gru_linear_forward.1} parent=5 // pred_region
      %s592 = ssub.s32 %s9, 2
      // Predicated region
      $region41: #{gru_linear_forward.1} parent=39 // pred_check
        %p593 = pneg %p106
      $region42: #{gru_linear_forward.1} parent=39 // pred_check_branch
        %595 = sbr.rel (%p593) target = $region44
      $region43: #{gru_linear_forward.1} parent=39 // pred_region
        %s596 = smul.u32 16, %s15
        %p597 = scmp.lt.s32.totalorder %s596, 31
        %s598 = scalar_select %p597, %s596, 31
        %s599 = smul.addr %s598, 8
        %s600 = scalar_lea.vmem %s3, %s599
      $region44: #{gru_linear_forward.1} parent=39 // pred_fallthru
        _
    $region40: #{gru_linear_forward.1} parent=5 // pred_fallthru
      _
  $region6: #{gru_linear_forward.1} parent=0 // loop_footer
    %s13 = sadd.s32 1, %s9
  $region7: #{gru_linear_forward.1} parent=0 // loop_footer_branch
    %8 = sbr.rel target = $region3
  $region8: #{gru_linear_forward.1} parent=0 // loop_exit
    _

</llo_original>
